<compile_context>
chip_gen: v5e
topology: v5e:2x2
jax: 0.10.0
libtpu: 0.0.40
codegen_flags: <defaults>
</compile_context>

<pallas_src>
import functools

import jax
import jax.numpy as jnp
from jax.experimental import pallas as pl
from jax.experimental.pallas import tpu as pltpu


def _attention_kernel(*refs, num_heads, dim_head, has_bias, approx_recip):
    """grid = (batch, query-tile, kv-tile); all heads handled inside the body."""
    if has_bias:
        (bias_ref, q_ref, k_ref, v_ref, wo_ref, bo_ref,
         o_ref, m_ref, l_ref, acc_ref, av_ref) = refs
    else:
        (q_ref, k_ref, v_ref, wo_ref, bo_ref,
         o_ref, m_ref, l_ref, acc_ref, av_ref) = refs
        bias_ref = None

    kv = pl.program_id(2)

    @pl.when(kv == 0)
    def _():
        m_ref[...] = jnp.full_like(m_ref, -jnp.inf)
        l_ref[...] = jnp.zeros_like(l_ref)
        acc_ref[...] = jnp.zeros_like(acc_ref)

    q = q_ref[0]                      # (H, tq, dh)  bf16, softmax scale folded in
    k = k_ref[0]                      # (H, tk, dh)  bf16
    v = v_ref[0]                      # (H, tk, dh)  bf16

    # Head-batched QK^T on the MXU (contraction on last dims, no K^T materialized).
    s = jnp.einsum("hqd,hkd->hqk", q, k,
                   preferred_element_type=jnp.float32)             # (H, tq, tk) f32
    if has_bias:
        # Singleton head/query/kv dims of the bias broadcast for free here.
        s = s + bias_ref[0].astype(jnp.float32)

    # Online (flash) softmax update; normalization deferred to the finalize step.
    m_prev = m_ref[...]
    m_new = jnp.maximum(m_prev, jnp.max(s, axis=-1, keepdims=True))
    alpha = jnp.exp(m_prev - m_new)                                 # (H, tq, 1)
    p = jnp.exp(s - m_new)                                          # (H, tq, tk) f32
    l_ref[...] = alpha * l_ref[...] + jnp.sum(p, axis=-1, keepdims=True)
    acc_ref[...] = alpha * acc_ref[...] + jnp.einsum(
        "hqk,hkd->hqd", p.astype(v.dtype), v,
        preferred_element_type=jnp.float32)                         # (H, tq, dh) f32
    m_ref[...] = m_new

    @pl.when(kv == pl.num_programs(2) - 1)
    def _():
        # Normalize each head, pack it into the (tq, inner) bf16 slab, then do ONE
        # inner-wide output GEMM against the full Wo (no dh-wide GEMMs, no per-head
        # f32 read-modify-write of a (tq, C) accumulator).
        for h in range(num_heads):
            l_h = l_ref[h]                                          # (tq, 1)
            inv = pl.reciprocal(l_h, approx=True) if approx_recip else 1.0 / l_h
            av_ref[:, h * dim_head:(h + 1) * dim_head] = (
                acc_ref[h] * inv).astype(av_ref.dtype)
        out = jnp.dot(av_ref[...], wo_ref[...],
                      preferred_element_type=jnp.float32) + bo_ref[...]
        o_ref[0] = out.astype(o_ref.dtype)


def _pick_tile(n, preferred, step):
    """A tile length that exactly divides n.

    Prefers the MXU/lane-friendly sizes in `preferred`, then the largest
    `step`-aligned divisor <= max(preferred), then n itself (small sequences).
    """
    for t in preferred:
        if n > t and n % t == 0:
            return t
    if n <= max(preferred):
        return n
    for t in range(max(preferred), step - 1, -step):
        if n % t == 0:
            return t
    # TODO(synk): pad + mask ragged sequence lengths instead of one huge block.
    return n


def attention_forward(x, params, context=None, attn_bias=None, *,
                      num_heads, dim_head, approx_recip=True):
    """Pallas TPU implementation of Attention.forward ((B, N, C) layout).

    Q/K/V projections are hoisted to plain XLA einsums (full MXU width, computed
    exactly once).  The Pallas kernel fuses flash-style attention (online softmax
    over KV tiles, all heads per step) with the output projection and bias.
    """
    B, N1, C = x.shape
    inner = num_heads * dim_head
    assert C == inner, "query_dim must equal num_heads * dim_head (reference reshape)"
    context = x if context is None else context
    N2 = context.shape[1]
    scale = float(dim_head) ** -0.5

    wq = params["wq"]                                   # (inner, C)
    wk = params["wkv"][:inner]                          # (inner, C)
    wv = params["wkv"][inner:]                          # (inner, C)
    wo_t = params["wo"].T.astype(jnp.bfloat16)          # (inner, C) for fused out-proj
    bo = params["bo"].reshape(1, C).astype(jnp.float32)

    def to_heads(t, n):
        return t.reshape(B, n, num_heads, dim_head).transpose(0, 2, 1, 3)

    x_f = x.astype(jnp.float32)
    ctx_f = context.astype(jnp.float32)
    # Projections: one-shot, full-width XLA GEMMs; softmax scale folded into q.
    q = to_heads((x_f @ wq.T) * scale, N1).astype(jnp.bfloat16)     # (B, H, N1, dh)
    k = to_heads(ctx_f @ wk.T, N2).astype(jnp.bfloat16)             # (B, H, N2, dh)
    v = to_heads(ctx_f @ wv.T, N2).astype(jnp.bfloat16)             # (B, H, N2, dh)

    # Tile sizes that exactly divide the sequences.  KV tiles are 128-aligned so the
    # (tq, tk) logits and the bias block stay lane-dense; modest sizes keep the
    # per-step footprint at a few MiB (v7x's 64 MiB VMEM) and give megacore >= 2
    # parallel grid points at typical shapes.
    tq = _pick_tile(N1, (256, 512, 128), 8)
    tk = _pick_tile(N2, (512, 256, 128), 128)
    n_q, n_kv = N1 // tq, N2 // tk
    grid = (B, n_q, n_kv)

    operands, in_specs = [], []
    has_bias = attn_bias is not None
    if has_bias:
        bias = jnp.asarray(attn_bias)
        while bias.ndim < 4:
            bias = bias[None]
        Bb, Hb, Qb, Kb = bias.shape
        assert (Bb in (1, B) and Hb in (1, num_heads)
                and Qb in (1, N1) and Kb in (1, N2)), \
            "attn_bias must broadcast against (B, num_heads, N1, N2)"
        bias = bias.astype(jnp.bfloat16)            # halve bias DMA (review item 10)
        bq = tq if Qb == N1 else 1
        bk = tk if Kb == N2 else 1

        def bias_map(b, i, kv, _B=(Bb == B), _Q=(Qb == N1), _K=(Kb == N2)):
            # Singleton broadcast dims resolved in the index_map, never materialized.
            return (b if _B else 0, 0, i if _Q else 0, kv if _K else 0)

        in_specs.append(pl.BlockSpec((1, Hb, bq, bk), bias_map))
        operands.append(bias)

    in_specs += [
        pl.BlockSpec((1, num_heads, tq, dim_head), lambda b, i, kv: (b, 0, i, 0)),   # q
        pl.BlockSpec((1, num_heads, tk, dim_head), lambda b, i, kv: (b, 0, kv, 0)),  # k
        pl.BlockSpec((1, num_heads, tk, dim_head), lambda b, i, kv: (b, 0, kv, 0)),  # v
        pl.BlockSpec((inner, C), lambda b, i, kv: (0, 0)),   # Wo: resident, DMA'd once
        pl.BlockSpec((1, C), lambda b, i, kv: (0, 0)),       # bo
    ]
    operands += [q, k, v, wo_t, bo]

    out_dtype = x.dtype
    out_itemsize = jnp.dtype(out_dtype).itemsize

    scratch_shapes = [
        pltpu.VMEM((num_heads, tq, 1), jnp.float32),          # running max  m
        pltpu.VMEM((num_heads, tq, 1), jnp.float32),          # running sum  l
        pltpu.VMEM((num_heads, tq, dim_head), jnp.float32),   # unnormalized attn @ V
        pltpu.VMEM((tq, inner), jnp.bfloat16),                # packed per-head outputs
    ]

    # ---- generation-aware VMEM limit (review item 6) ----
    block_bytes = (
        2 * num_heads * tq * dim_head * 2                  # q block (double-buffered)
        + 2 * 2 * num_heads * tk * dim_head * 2            # k, v blocks
        + 2 * inner * C * 2 + 2 * C * 4                    # Wo, bo
        + 2 * tq * C * out_itemsize                        # output block
        + (2 * Hb * bq * bk * 2 if has_bias else 0)        # bias block
        + num_heads * tq * (2 + dim_head) * 4              # m, l, acc scratch
        + tq * inner * 2                                   # av slab
        + num_heads * tq * tk * (4 + 2)                    # live logits f32 + p bf16
    )
    try:
        vmem_cap = int(getattr(pltpu.get_tpu_info(), "vmem_capacity_bytes",
                               64 * 1024 * 1024))
    except Exception:  # conservative fallback (assume v7x-sized per-core VMEM)
        vmem_cap = 64 * 1024 * 1024
    vmem_limit = int(min(max(int(1.3 * block_bytes) + (8 << 20), 32 << 20),
                         int(0.75 * vmem_cap)))

    # ---- cost estimate matching the kernel's actual structure (review item 10) ----
    kv_refetch = n_q if n_kv > 1 else 1
    flops = int(4 * B * num_heads * N1 * N2 * dim_head      # QK^T + P@V
                + 2 * B * N1 * inner * C)                   # fused output projection
    bytes_accessed = int(
        q.size * 2 + (k.size + v.size) * 2 * kv_refetch
        + wo_t.size * 2 + bo.size * 4
        + B * N1 * C * out_itemsize
        + ((Hb * bq * bk * 2) * B * n_q * n_kv if has_bias else 0))
    cost = pl.CostEstimate(flops=flops,
                           transcendentals=int(B * num_heads * N1 * N2),
                           bytes_accessed=bytes_accessed)

    kernel = functools.partial(_attention_kernel, num_heads=num_heads,
                               dim_head=dim_head, has_bias=has_bias,
                               approx_recip=approx_recip)

    return pl.pallas_call(
        kernel,
        out_shape=jax.ShapeDtypeStruct((B, N1, C), out_dtype),
        grid_spec=pltpu.PrefetchScalarGridSpec(
            num_scalar_prefetch=0,
            grid=grid,
            in_specs=in_specs,
            out_specs=pl.BlockSpec((1, tq, C), lambda b, i, kv: (b, i, 0)),
            scratch_shapes=scratch_shapes,
        ),
        compiler_params=pltpu.CompilerParams(
            dimension_semantics=("parallel", "parallel", "arbitrary"),
            vmem_limit_bytes=vmem_limit,
        ),
        cost_estimate=cost,
    )(*operands)


def attention_reference(x, params, context=None, attn_bias=None, *,
                        num_heads, dim_head):
    """Plain-JAX (f32) mirror of the PyTorch forward, used for verification."""
    B, N1, C = x.shape
    h = num_heads
    inner = h * dim_head
    context = x if context is None else context
    N2 = context.shape[1]
    q = x @ params["wq"].T
    kv = context @ params["wkv"].T
    k, v = kv[..., :inner], kv[..., inner:]
    q = q.reshape(B, N1, h, C // h).transpose(0, 2, 1, 3)
    k = k.reshape(B, N2, h, C // h).transpose(0, 2, 1, 3)
    v = v.reshape(B, N2, h, C // h).transpose(0, 2, 1, 3)
    sim = (q @ jnp.swapaxes(k, -2, -1)) * (float(dim_head) ** -0.5)
    if attn_bias is not None:
        sim = sim + attn_bias
    attn = jax.nn.softmax(sim, axis=-1)
    o = (attn @ v).transpose(0, 2, 1, 3).reshape(B, N1, C)
    return o @ params["wo"].T + params["bo"]


def init_params(key, query_dim, num_heads, dim_head):
    """Deterministic init; shapes match the PyTorch module (qkv_bias=False)."""
    inner = num_heads * dim_head
    k1, k2, k3, k4 = jax.random.split(key, 4)
    s_q = 1.0 / (query_dim ** 0.5)
    s_o = 1.0 / (inner ** 0.5)
    return {
        "wq":  jax.random.uniform(k1, (inner, query_dim), jnp.float32, -s_q, s_q),
        "wkv": jax.random.uniform(k2, (2 * inner, query_dim), jnp.float32, -s_q, s_q),
        "wo":  jax.random.uniform(k3, (query_dim, inner), jnp.float32, -s_o, s_o),
        "bo":  jax.random.uniform(k4, (query_dim,), jnp.float32, -s_o, s_o),
    }


if __name__ == "__main__":
    # Small, forward-consistent shapes: query_dim = num_heads * dim_head.
    B, N1 = 2, 8
    num_heads, dim_head = 2, 16
    C = num_heads * dim_head  # 32

    key = jax.random.PRNGKey(0)
    kx, kc, kb, kp = jax.random.split(key, 4)
    x = jax.random.normal(kx, (B, N1, C), jnp.float32)
    params = init_params(kp, C, num_heads, dim_head)

    # 1) Self-attention, no bias (single KV tile; no bias operand is created at all).
    out = attention_forward(x, params, num_heads=num_heads, dim_head=dim_head)
    out = jax.block_until_ready(out)
    ref = attention_reference(x, params, num_heads=num_heads, dim_head=dim_head)
    assert out.shape == (B, N1, C)
    assert jnp.allclose(out, ref, atol=2.5e-2, rtol=2.5e-2), \
        "Pallas kernel mismatch vs reference (self-attention)"

    # 2) Cross-attention with an attn_bias broadcast over the batch dim; N2=256 so the
    #    KV axis is tiled (tk=128) and the online-softmax accumulation path runs.
    N2 = 256
    context = jax.random.normal(kc, (B, N2, C), jnp.float32)
    bias = 0.1 * jax.random.normal(kb, (1, num_heads, N1, N2), jnp.float32)
    out2 = attention_forward(x, params, context=context, attn_bias=bias,
                             num_heads=num_heads, dim_head=dim_head)
    out2 = jax.block_until_ready(out2)
    ref2 = attention_reference(x, params, context=context, attn_bias=bias,
                               num_heads=num_heads, dim_head=dim_head)
    assert jnp.allclose(out2, ref2, atol=2.5e-2, rtol=2.5e-2), \
        "Pallas kernel mismatch vs reference (cross-attention + bias + KV tiling)"

    print("KERNEL_OK")
</pallas_src>

<mosaic_0001>
module attributes {stable_mosaic.version = 11 : i64} {
  func.func @_attention_kernel(%arg0: i32, %arg1: i32, %arg2: i32, %arg3: memref<1x2x8x16xbf16, #tpu.memory_space<vmem>>, %arg4: memref<1x2x8x16xbf16, #tpu.memory_space<vmem>>, %arg5: memref<1x2x8x16xbf16, #tpu.memory_space<vmem>>, %arg6: memref<32x32xbf16, #tpu.memory_space<vmem>>, %arg7: memref<1x32xf32, #tpu.memory_space<vmem>>, %arg8: memref<1x8x32xf32, #tpu.memory_space<vmem>>, %arg9: memref<2x8x1xf32, #tpu.memory_space<vmem>>, %arg10: memref<2x8x1xf32, #tpu.memory_space<vmem>>, %arg11: memref<2x8x16xf32, #tpu.memory_space<vmem>>, %arg12: memref<8x32xbf16, #tpu.memory_space<vmem>>) attributes {dimension_semantics = [#tpu.dimension_semantics<parallel>, #tpu.dimension_semantics<parallel>, #tpu.dimension_semantics<arbitrary>], iteration_bounds = array<i64: 2, 1, 1>, scalar_prefetch = 0 : i64, scratch_operands = 4 : i64, tpu.core_type = #tpu.core_type<tc>, window_params = [{transform_indices = @transform_0, window_bounds = array<i64: 1, 2, 8, 16>}, {transform_indices = @transform_1, window_bounds = array<i64: 1, 2, 8, 16>}, {transform_indices = @transform_2, window_bounds = array<i64: 1, 2, 8, 16>}, {pipeline_mode = #tpu.pipeline_mode<synchronous>, transform_indices = @transform_3, window_bounds = array<i64: 32, 32>}, {pipeline_mode = #tpu.pipeline_mode<synchronous>, transform_indices = @transform_4, window_bounds = array<i64: 1, 32>}, {transform_indices = @transform_5, window_bounds = array<i64: 1, 8, 32>}]} {
    %c0_i32 = arith.constant 0 : i32
    %0 = arith.cmpi eq, %arg2, %c0_i32 : i32
    %1 = arith.extui %0 : i1 to i32
    %c0_i32_0 = arith.constant 0 : i32
    %2 = arith.cmpi ne, %1, %c0_i32_0 : i32
    scf.if %2 {
      %cst_35 = arith.constant 0xFF800000 : f32
      %36 = vector.broadcast %cst_35 : f32 to vector<2x8x1xf32>
      %c0_36 = arith.constant 0 : index
      %c0_37 = arith.constant 0 : index
      %c0_38 = arith.constant 0 : index
      %37 = vector.load %arg9[%c0_36, %c0_37, %c0_38] : memref<2x8x1xf32, #tpu.memory_space<vmem>>, vector<2x8x1xf32>
      tpu.vector_store %arg9[%c0_36, %c0_37, %c0_38], %36 {strides = array<i32>} : memref<2x8x1xf32, #tpu.memory_space<vmem>>, vector<2x8x1xf32>,
      %cst_39 = arith.constant 0.000000e+00 : f32
      %38 = vector.broadcast %cst_39 : f32 to vector<2x8x1xf32>
      %c0_40 = arith.constant 0 : index
      %c0_41 = arith.constant 0 : index
      %c0_42 = arith.constant 0 : index
      %39 = vector.load %arg10[%c0_40, %c0_41, %c0_42] : memref<2x8x1xf32, #tpu.memory_space<vmem>>, vector<2x8x1xf32>
      tpu.vector_store %arg10[%c0_40, %c0_41, %c0_42], %38 {strides = array<i32>} : memref<2x8x1xf32, #tpu.memory_space<vmem>>, vector<2x8x1xf32>,
      %cst_43 = arith.constant 0.000000e+00 : f32
      %40 = vector.broadcast %cst_43 : f32 to vector<2x8x16xf32>
      %c0_44 = arith.constant 0 : index
      %c0_45 = arith.constant 0 : index
      %c0_46 = arith.constant 0 : index
      %41 = vector.load %arg11[%c0_44, %c0_45, %c0_46] : memref<2x8x16xf32, #tpu.memory_space<vmem>>, vector<2x8x16xf32>
      tpu.vector_store %arg11[%c0_44, %c0_45, %c0_46], %40 {strides = array<i32>} : memref<2x8x16xf32, #tpu.memory_space<vmem>>, vector<2x8x16xf32>,
    } else {
    }
    %c0 = arith.constant 0 : index
    %c0_1 = arith.constant 0 : index
    %c0_2 = arith.constant 0 : index
    %c0_3 = arith.constant 0 : index
    %3 = vector.load %arg3[%c0, %c0_1, %c0_2, %c0_3] : memref<1x2x8x16xbf16, #tpu.memory_space<vmem>>, vector<1x2x8x16xbf16>
    %4 = vector.shape_cast %3 : vector<1x2x8x16xbf16> to vector<2x8x16xbf16>
    %c0_4 = arith.constant 0 : index
    %c0_5 = arith.constant 0 : index
    %c0_6 = arith.constant 0 : index
    %c0_7 = arith.constant 0 : index
    %5 = vector.load %arg4[%c0_4, %c0_5, %c0_6, %c0_7] : memref<1x2x8x16xbf16, #tpu.memory_space<vmem>>, vector<1x2x8x16xbf16>
    %6 = vector.shape_cast %5 : vector<1x2x8x16xbf16> to vector<2x8x16xbf16>
    %c0_8 = arith.constant 0 : index
    %c0_9 = arith.constant 0 : index
    %c0_10 = arith.constant 0 : index
    %c0_11 = arith.constant 0 : index
    %7 = vector.load %arg5[%c0_8, %c0_9, %c0_10, %c0_11] : memref<1x2x8x16xbf16, #tpu.memory_space<vmem>>, vector<1x2x8x16xbf16>
    %8 = vector.shape_cast %7 : vector<1x2x8x16xbf16> to vector<2x8x16xbf16>
    "tpu.trace_start"() <{level = 10 : i32, message = "hqd,hkd->hqk"}> : () -> ()
    %cst = arith.constant dense<0.000000e+00> : vector<2x8x8xf32>
    %9 = tpu.matmul %4, %6, %cst {dimension_numbers = #tpu.dot_dimension_numbers<[2], [2], [1], [1], [0, 0, 0, 1, 1, 1], [0], [0]>} : vector<2x8x16xbf16>, vector<2x8x16xbf16>, vector<2x8x8xf32> -> vector<2x8x8xf32>
    "tpu.trace_stop"() : () -> ()
    %c0_12 = arith.constant 0 : index
    %c0_13 = arith.constant 0 : index
    %c0_14 = arith.constant 0 : index
    %10 = vector.load %arg9[%c0_12, %c0_13, %c0_14] : memref<2x8x1xf32, #tpu.memory_space<vmem>>, vector<2x8x1xf32>
    %cst_15 = arith.constant dense<0xFF800000> : vector<2x8xf32>
    %11 = vector.multi_reduction <maximumf>, %9, %cst_15 [2] : vector<2x8x8xf32> to vector<2x8xf32>
    %12 = vector.shape_cast %11 : vector<2x8xf32> to vector<2x8x1xf32>
    %13 = arith.maximumf %10, %12 : vector<2x8x1xf32>
    %14 = arith.subf %10, %13 : vector<2x8x1xf32>
    %15 = math.exp %14 : vector<2x8x1xf32>
    %16 = vector.broadcast %13 : vector<2x8x1xf32> to vector<2x8x8xf32>
    %17 = arith.subf %9, %16 : vector<2x8x8xf32>
    %18 = math.exp %17 : vector<2x8x8xf32>
    %c0_16 = arith.constant 0 : index
    %c0_17 = arith.constant 0 : index
    %c0_18 = arith.constant 0 : index
    %19 = vector.load %arg10[%c0_16, %c0_17, %c0_18] : memref<2x8x1xf32, #tpu.memory_space<vmem>>, vector<2x8x1xf32>
    %20 = arith.mulf %15, %19 : vector<2x8x1xf32>
    %cst_19 = arith.constant dense<0.000000e+00> : vector<2x8xf32>
    %21 = vector.multi_reduction <add>, %18, %cst_19 [2] : vector<2x8x8xf32> to vector<2x8xf32>
    %22 = vector.shape_cast %21 : vector<2x8xf32> to vector<2x8x1xf32>
    %23 = arith.addf %20, %22 : vector<2x8x1xf32>
    %c0_20 = arith.constant 0 : index
    %c0_21 = arith.constant 0 : index
    %c0_22 = arith.constant 0 : index
    %24 = vector.load %arg10[%c0_20, %c0_21, %c0_22] : memref<2x8x1xf32, #tpu.memory_space<vmem>>, vector<2x8x1xf32>
    tpu.vector_store %arg10[%c0_20, %c0_21, %c0_22], %23 {strides = array<i32>} : memref<2x8x1xf32, #tpu.memory_space<vmem>>, vector<2x8x1xf32>,
    %c0_23 = arith.constant 0 : index
    %c0_24 = arith.constant 0 : index
    %c0_25 = arith.constant 0 : index
    %25 = vector.load %arg11[%c0_23, %c0_24, %c0_25] : memref<2x8x16xf32, #tpu.memory_space<vmem>>, vector<2x8x16xf32>
    %26 = vector.broadcast %15 : vector<2x8x1xf32> to vector<2x8x16xf32>
    %27 = arith.mulf %26, %25 : vector<2x8x16xf32>
    %28 = arith.truncf %18 : vector<2x8x8xf32> to vector<2x8x8xbf16>
    "tpu.trace_start"() <{level = 10 : i32, message = "hqk,hkd->hqd"}> : () -> ()
    %cst_26 = arith.constant dense<0.000000e+00> : vector<2x8x16xf32>
    %29 = tpu.matmul %28, %8, %cst_26 {dimension_numbers = #tpu.dot_dimension_numbers<[2], [1], [1], [2], [0, 0, 0, 1, 1, 2], [0], [0]>} : vector<2x8x8xbf16>, vector<2x8x16xbf16>, vector<2x8x16xf32> -> vector<2x8x16xf32>
    "tpu.trace_stop"() : () -> ()
    %30 = arith.addf %27, %29 : vector<2x8x16xf32>
    %c0_27 = arith.constant 0 : index
    %c0_28 = arith.constant 0 : index
    %c0_29 = arith.constant 0 : index
    %31 = vector.load %arg11[%c0_27, %c0_28, %c0_29] : memref<2x8x16xf32, #tpu.memory_space<vmem>>, vector<2x8x16xf32>
    tpu.vector_store %arg11[%c0_27, %c0_28, %c0_29], %30 {strides = array<i32>} : memref<2x8x16xf32, #tpu.memory_space<vmem>>, vector<2x8x16xf32>,
    %c0_30 = arith.constant 0 : index
    %c0_31 = arith.constant 0 : index
    %c0_32 = arith.constant 0 : index
    %32 = vector.load %arg9[%c0_30, %c0_31, %c0_32] : memref<2x8x1xf32, #tpu.memory_space<vmem>>, vector<2x8x1xf32>
    tpu.vector_store %arg9[%c0_30, %c0_31, %c0_32], %13 {strides = array<i32>} : memref<2x8x1xf32, #tpu.memory_space<vmem>>, vector<2x8x1xf32>,
    %c0_i32_33 = arith.constant 0 : i32
    %33 = arith.cmpi eq, %arg2, %c0_i32_33 : i32
    %34 = arith.extui %33 : i1 to i32
    %c0_i32_34 = arith.constant 0 : i32
    %35 = arith.cmpi ne, %34, %c0_i32_34 : i32
    scf.if %35 {
      %c0_35 = arith.constant 0 : index
      %c0_36 = arith.constant 0 : index
      %c0_37 = arith.constant 0 : index
      %36 = vector.load %arg10[%c0_35, %c0_36, %c0_37] : memref<2x8x1xf32, #tpu.memory_space<vmem>>, vector<1x8x1xf32>
      %37 = vector.shape_cast %36 : vector<1x8x1xf32> to vector<8x1xf32>
      %38 = tpu.reciprocal %37 {approx = true} : vector<8x1xf32> -> vector<8x1xf32>
      %c0_38 = arith.constant 0 : index
      %c0_39 = arith.constant 0 : index
      %c0_40 = arith.constant 0 : index
      %39 = vector.load %arg11[%c0_38, %c0_39, %c0_40] : memref<2x8x16xf32, #tpu.memory_space<vmem>>, vector<1x8x16xf32>
      %40 = vector.shape_cast %39 : vector<1x8x16xf32> to vector<8x16xf32>
      %41 = vector.broadcast %38 : vector<8x1xf32> to vector<8x16xf32>
      %42 = arith.mulf %40, %41 : vector<8x16xf32>
      %43 = arith.truncf %42 : vector<8x16xf32> to vector<8x16xbf16>
      %c0_41 = arith.constant 0 : index
      %c0_42 = arith.constant 0 : index
      %44 = vector.load %arg12[%c0_41, %c0_42] : memref<8x32xbf16, #tpu.memory_space<vmem>>, vector<8x16xbf16>
      tpu.vector_store %arg12[%c0_41, %c0_42], %43 {strides = array<i32>} : memref<8x32xbf16, #tpu.memory_space<vmem>>, vector<8x16xbf16>,
      %c1 = arith.constant 1 : index
      %c0_43 = arith.constant 0 : index
      %c0_44 = arith.constant 0 : index
      %45 = vector.load %arg10[%c1, %c0_43, %c0_44] : memref<2x8x1xf32, #tpu.memory_space<vmem>>, vector<1x8x1xf32>
      %46 = vector.shape_cast %45 : vector<1x8x1xf32> to vector<8x1xf32>
      %47 = tpu.reciprocal %46 {approx = true} : vector<8x1xf32> -> vector<8x1xf32>
      %c1_45 = arith.constant 1 : index
      %c0_46 = arith.constant 0 : index
      %c0_47 = arith.constant 0 : index
      %48 = vector.load %arg11[%c1_45, %c0_46, %c0_47] : memref<2x8x16xf32, #tpu.memory_space<vmem>>, vector<1x8x16xf32>
      %49 = vector.shape_cast %48 : vector<1x8x16xf32> to vector<8x16xf32>
      %50 = vector.broadcast %47 : vector<8x1xf32> to vector<8x16xf32>
      %51 = arith.mulf %49, %50 : vector<8x16xf32>
      %52 = arith.truncf %51 : vector<8x16xf32> to vector<8x16xbf16>
      %c0_48 = arith.constant 0 : index
      %c16 = arith.constant 16 : index
      %53 = vector.load %arg12[%c0_48, %c16] : memref<8x32xbf16, #tpu.memory_space<vmem>>, vector<8x16xbf16>
      tpu.vector_store %arg12[%c0_48, %c16], %52 {strides = array<i32>} : memref<8x32xbf16, #tpu.memory_space<vmem>>, vector<8x16xbf16>,
      %c0_49 = arith.constant 0 : index
      %c0_50 = arith.constant 0 : index
      %54 = vector.load %arg12[%c0_49, %c0_50] : memref<8x32xbf16, #tpu.memory_space<vmem>>, vector<8x32xbf16>
      %c0_51 = arith.constant 0 : index
      %c0_52 = arith.constant 0 : index
      %55 = vector.load %arg6[%c0_51, %c0_52] : memref<32x32xbf16, #tpu.memory_space<vmem>>, vector<32x32xbf16>
      %cst_53 = arith.constant dense<0.000000e+00> : vector<8x32xf32>
      %56 = tpu.matmul %54, %55, %cst_53 {dimension_numbers = #tpu.dot_dimension_numbers<[1], [0], [0], [1], [0, 0, 1, 1], [], []>} : vector<8x32xbf16>, vector<32x32xbf16>, vector<8x32xf32> -> vector<8x32xf32>
      %c0_54 = arith.constant 0 : index
      %c0_55 = arith.constant 0 : index
      %57 = vector.load %arg7[%c0_54, %c0_55] : memref<1x32xf32, #tpu.memory_space<vmem>>, vector<1x32xf32>
      %58 = vector.broadcast %57 : vector<1x32xf32> to vector<8x32xf32>
      %59 = arith.addf %56, %58 : vector<8x32xf32>
      %c0_56 = arith.constant 0 : index
      %c0_57 = arith.constant 0 : index
      %c0_58 = arith.constant 0 : index
      %60 = vector.load %arg8[%c0_56, %c0_57, %c0_58] : memref<1x8x32xf32, #tpu.memory_space<vmem>>, vector<1x8x32xf32>
      %61 = vector.shape_cast %60 : vector<1x8x32xf32> to vector<8x32xf32>
      %62 = vector.shape_cast %59 : vector<8x32xf32> to vector<1x8x32xf32>
      tpu.vector_store %arg8[%c0_56, %c0_57, %c0_58], %62 {strides = array<i32>} : memref<1x8x32xf32, #tpu.memory_space<vmem>>, vector<1x8x32xf32>,
    } else {
    }
    return
  }
  func.func @transform_0(%arg0: i32, %arg1: i32, %arg2: i32) -> (i32, i32, i32, i32) {
    %c0_i32 = arith.constant 0 : i32
    %c0_i32_0 = arith.constant 0 : i32
    %c0_i32_1 = arith.constant 0 : i32
    return %arg0, %c0_i32, %arg1, %c0_i32_0 : i32, i32, i32, i32
  }
  func.func @transform_1(%arg0: i32, %arg1: i32, %arg2: i32) -> (i32, i32, i32, i32) {
    %c0_i32 = arith.constant 0 : i32
    %c0_i32_0 = arith.constant 0 : i32
    %c0_i32_1 = arith.constant 0 : i32
    return %arg0, %c0_i32, %arg2, %c0_i32_0 : i32, i32, i32, i32
  }
  func.func @transform_2(%arg0: i32, %arg1: i32, %arg2: i32) -> (i32, i32, i32, i32) {
    %c0_i32 = arith.constant 0 : i32
    %c0_i32_0 = arith.constant 0 : i32
    %c0_i32_1 = arith.constant 0 : i32
    return %arg0, %c0_i32, %arg2, %c0_i32_0 : i32, i32, i32, i32
  }
  func.func @transform_3(%arg0: i32, %arg1: i32, %arg2: i32) -> (i32, i32) {
    %c0_i32 = arith.constant 0 : i32
    %c0_i32_0 = arith.constant 0 : i32
    %c0_i32_1 = arith.constant 0 : i32
    return %c0_i32, %c0_i32_0 : i32, i32
  }
  func.func @transform_4(%arg0: i32, %arg1: i32, %arg2: i32) -> (i32, i32) {
    %c0_i32 = arith.constant 0 : i32
    %c0_i32_0 = arith.constant 0 : i32
    %c0_i32_1 = arith.constant 0 : i32
    return %c0_i32, %c0_i32_0 : i32, i32
  }
  func.func @transform_5(%arg0: i32, %arg1: i32, %arg2: i32) -> (i32, i32, i32) {
    %c0_i32 = arith.constant 0 : i32
    %c0_i32_0 = arith.constant 0 : i32
    return %arg0, %arg1, %c0_i32 : i32, i32, i32
  }
}

</mosaic_0001>

<llo_original>
// kernel: tpu_custom_call.1
$region0: #{tpu_custom_call.1}
  #allocation0 [shape = 'u32[]', space=smem, size = 0x4, offset = 0x4, fixed_abs, tag = 'smem constant byte address 0x4 - core index']
  #allocation1 [shape = 'u32[72,128]{1,0:T(1,128)}', space=vmem, size = 0x9000, scoped, tag = 'internal scratch']
  #allocation2 [shape = 'f32[2,8,1]{2,1,0:T(8,128)}', space=vmem, size = 0x2000, scoped, tag = 'scratch operand']
  #allocation3 [shape = 'f32[2,8,1]{2,1,0:T(8,128)}', space=vmem, size = 0x2000, scoped, tag = 'scratch operand']
  #allocation4 [shape = 'f32[2,8,16]{2,1,0:T(8,128)}', space=vmem, size = 0x2000, scoped, tag = 'scratch operand']
  #allocation5 [shape = 'bf16[8,32]{1,0:T(8,128)(2,1)}', space=vmem, size = 0x800, scoped, tag = 'scratch operand']
  %s0 = inlined_call_operand.hbm [shape: bf16[2,2,8,16], index: 0, kind: input, shape index: {}]
  %s1 = inlined_call_operand.hbm [shape: bf16[2,2,8,16], index: 1, kind: input, shape index: {}]
  %s2 = inlined_call_operand.hbm [shape: bf16[2,2,8,16], index: 2, kind: input, shape index: {}]
  %s3 = inlined_call_operand.hbm [shape: bf16[32,32], index: 3, kind: input, shape index: {}]
  %s4 = inlined_call_operand.vmem [shape: f32[1,32], index: 4, kind: input, shape index: {}]
  %s5 = inlined_call_operand.hbm [shape: f32[2,8,32], index: 5, kind: output, shape index: {}]
  %s6 = sld [smem:[#allocation0]]
  $region77: #{tpu_custom_call.1} parent=0
    _
  %s8 = ssub.s32 1, %s6
  %s9 = scalar_select 0, %s8, %s6
  $region1: #{tpu_custom_call.1} parent=0
    #allocation6 [shape = 'u8[8192]{0}', space=vmem, size = 0x2000, scoped, tag = 'input window, operand 0']
    #allocation7 [shape = 's32[2]{0}', space=sflag, size = 0x8, scoped, tag = 'scoped memory for tpu_custom_call.1']
    #allocation8 [shape = 's32[2]{0}', space=sflag, size = 0x8, scoped, tag = 'scoped memory for tpu_custom_call.1']
    #allocation9 [shape = 'u8[8192]{0}', space=vmem, size = 0x2000, scoped, tag = 'input window, operand 1']
    #allocation10 [shape = 's32[2]{0}', space=sflag, size = 0x8, scoped, tag = 'scoped memory for tpu_custom_call.1']
    #allocation11 [shape = 'u8[8192]{0}', space=vmem, size = 0x2000, scoped, tag = 'input window, operand 2']
    #allocation12 [shape = 'u8[8192]{0}', space=vmem, size = 0x2000, scoped, tag = 'input window, operand 3, single buffered']
    #allocation13 [shape = 's32[1]{0}', space=sflag, size = 0x4, scoped, tag = 'scoped memory for tpu_custom_call.1']
    #allocation14 [shape = 'u8[8192]{0}', space=vmem, size = 0x2000, scoped, tag = 'output window, operand 0']
    %10 = vsyncpa [#allocation7], 0
    %s11 = scalar_lea.sflag [#allocation7], 1
    %12 = vsyncpa %s11, 0
    %13 = vsyncpa [#allocation10], 0
    %s14 = scalar_lea.sflag [#allocation10], 1
    %15 = vsyncpa %s14, 0
    %16 = vsyncpa [#allocation13], 0
    %17 = vsyncpa [#allocation8], 0
    %s18 = scalar_lea.sflag [#allocation8], 1
    %19 = vsyncpa %s18, 0
    loop: start=0, step=1, limit=4
    $region2: #{tpu_custom_call.1} parent=1 // loop_pre_header
      _
    $region3: #{tpu_custom_call.1} parent=1 // loop_header
      %s21 = sphi 0, %s25
      %p22 = scmp.ge.s32.totalorder %s21, 4
      %s28 = sphi 0, %s47
      %s29 = sphi 0, %s43
      %s30 = sphi 0, %s39
      %s31 = sphi 0, %s28
      %s32 = sphi 0, %s29
      %s33 = sphi 0, %s30
      %s34 = sphi 0, %s31
      %s35 = sphi 0, %s32
      %s36 = sphi 0, %s33
      %s52 = sphi 0, %s54
      %s55 = sphi 0, %s52
      %s56 = sphi 0, %s55
      %s72 = sphi 0, %s56
      %s80 = sphi 0, %s82
      %s83 = sphi 0, %s80
      %s84 = sphi 0, %s83
      %s100 = sphi 0, %s84
      %s108 = sphi 0, %s110
      %s111 = sphi 0, %s108
      %s112 = sphi 0, %s111
      %s128 = sphi 0, %s112
      %s132 = sphi 0, %s132
      %s134 = sphi 0, %s132
      %s135 = sphi 0, %s134
      %s149 = sphi 0, %s135
      %s153 = sphi 0, %s153
      %s155 = sphi 0, %s153
      %s156 = sphi 0, %s155
      %s170 = sphi 0, %s156
      %s178 = sphi 0, %s180
      %s181 = sphi 0, %s178
      %s182 = sphi 0, %s181
      %s198 = sphi 0, %s182
    $region4: #{tpu_custom_call.1} parent=1 // loop_header_branch
      %24 = sbr.rel (%p22) target = $region8
    $region5: #{tpu_custom_call.1} parent=1 // loop_body
      %s26 = ssub.s32 %s21, 1
      %s27 = ssub.s32 %s21, 2
      %s37 = sadd.s32 1, %s30
      %p38 = scmp.ge.s32.totalorder %s37, 1
      %s39 = scalar_select %p38, 0, %s37
      %s40 = sadd.s32 1, %s29
      %s41 = scalar_select %p38, %s40, %s29
      %p42 = scmp.ge.s32.totalorder %s41, 1
      %s43 = scalar_select %p42, 0, %s41
      %s44 = sadd.s32 1, %s28
      %s45 = scalar_select %p42, %s44, %s28
      %p46 = scmp.ge.s32.totalorder %s45, 2
      %s47 = scalar_select %p46, 0, %s45
      %s48 = ssub.s32 %s28, %s47
      %s49 = ssub.s32 %s29, %s43
      %s50 = sor.u32 %s48, %s49
      %p51 = scmp.eq.s32.totalorder %s50, 0
      %s53 = sadd.s32 %s52, 1
      %s54 = scalar_select %p51, %s52, %s53
      %p57 = pneg %p51
      %p58 = scmp.eq.s32.totalorder %s21, 1
      %p59 = por %p57, %p58
      %p60 = scmp.ne.s32.totalorder %s52, %s55
      %p61 = scmp.eq.s32.totalorder %s21, 0
      %p62 = por %p60, %p61
      %p63 = scmp.ne.s32.totalorder %s52, %s55
      %p64 = scmp.eq.s32.totalorder %s26, 1
      %p65 = por %p63, %p64
      %p66 = scmp.ne.s32.totalorder %s55, %s56
      %p67 = scmp.eq.s32.totalorder %s26, 0
      %p68 = por %p66, %p67
      %p69 = scmp.ne.s32.totalorder %s55, %s56
      %p70 = scmp.eq.s32.totalorder %s27, 1
      %p71 = por %p69, %p70
      %p73 = scmp.ne.s32.totalorder %s56, %s72
      %p74 = scmp.eq.s32.totalorder %s27, 0
      %p75 = por %p73, %p74
      %s76 = ssub.s32 %s28, %s47
      %s77 = ssub.s32 %s30, %s39
      %s78 = sor.u32 %s76, %s77
      %p79 = scmp.eq.s32.totalorder %s78, 0
      %s81 = sadd.s32 %s80, 1
      %s82 = scalar_select %p79, %s80, %s81
      %p85 = pneg %p79
      %p86 = scmp.eq.s32.totalorder %s21, 1
      %p87 = por %p85, %p86
      %p88 = scmp.ne.s32.totalorder %s80, %s83
      %p89 = scmp.eq.s32.totalorder %s21, 0
      %p90 = por %p88, %p89
      %p91 = scmp.ne.s32.totalorder %s80, %s83
      %p92 = scmp.eq.s32.totalorder %s26, 1
      %p93 = por %p91, %p92
      %p94 = scmp.ne.s32.totalorder %s83, %s84
      %p95 = scmp.eq.s32.totalorder %s26, 0
      %p96 = por %p94, %p95
      %p97 = scmp.ne.s32.totalorder %s83, %s84
      %p98 = scmp.eq.s32.totalorder %s27, 1
      %p99 = por %p97, %p98
      %p101 = scmp.ne.s32.totalorder %s84, %s100
      %p102 = scmp.eq.s32.totalorder %s27, 0
      %p103 = por %p101, %p102
      %s104 = ssub.s32 %s28, %s47
      %s105 = ssub.s32 %s30, %s39
      %s106 = sor.u32 %s104, %s105
      %p107 = scmp.eq.s32.totalorder %s106, 0
      %s109 = sadd.s32 %s108, 1
      %s110 = scalar_select %p107, %s108, %s109
      %p113 = pneg %p107
      %p114 = scmp.eq.s32.totalorder %s21, 1
      %p115 = por %p113, %p114
      %p116 = scmp.ne.s32.totalorder %s108, %s111
      %p117 = scmp.eq.s32.totalorder %s21, 0
      %p118 = por %p116, %p117
      %p119 = scmp.ne.s32.totalorder %s108, %s111
      %p120 = scmp.eq.s32.totalorder %s26, 1
      %p121 = por %p119, %p120
      %p122 = scmp.ne.s32.totalorder %s111, %s112
      %p123 = scmp.eq.s32.totalorder %s26, 0
      %p124 = por %p122, %p123
      %p125 = scmp.ne.s32.totalorder %s111, %s112
      %p126 = scmp.eq.s32.totalorder %s27, 1
      %p127 = por %p125, %p126
      %p129 = scmp.ne.s32.totalorder %s112, %s128
      %p130 = scmp.eq.s32.totalorder %s27, 0
      %p131 = por %p129, %p130
      %s133 = sadd.s32 %s132, 1
      %p136 = scmp.eq.s32.totalorder %s21, 1
      %p137 = scmp.ne.s32.totalorder %s132, %s134
      %p138 = scmp.eq.s32.totalorder %s21, 0
      %p139 = por %p137, %p138
      %p140 = scmp.ne.s32.totalorder %s132, %s134
      %p141 = scmp.eq.s32.totalorder %s26, 1
      %p142 = por %p140, %p141
      %p143 = scmp.ne.s32.totalorder %s134, %s135
      %p144 = scmp.eq.s32.totalorder %s26, 0
      %p145 = por %p143, %p144
      %p146 = scmp.ne.s32.totalorder %s134, %s135
      %p147 = scmp.eq.s32.totalorder %s27, 1
      %p148 = por %p146, %p147
      %p150 = scmp.ne.s32.totalorder %s135, %s149
      %p151 = scmp.eq.s32.totalorder %s27, 0
      %p152 = por %p150, %p151
      %s154 = sadd.s32 %s153, 1
      %p157 = scmp.eq.s32.totalorder %s21, 1
      %p158 = scmp.ne.s32.totalorder %s153, %s155
      %p159 = scmp.eq.s32.totalorder %s21, 0
      %p160 = por %p158, %p159
      %p161 = scmp.ne.s32.totalorder %s153, %s155
      %p162 = scmp.eq.s32.totalorder %s26, 1
      %p163 = por %p161, %p162
      %p164 = scmp.ne.s32.totalorder %s155, %s156
      %p165 = scmp.eq.s32.totalorder %s26, 0
      %p166 = por %p164, %p165
      %p167 = scmp.ne.s32.totalorder %s155, %s156
      %p168 = scmp.eq.s32.totalorder %s27, 1
      %p169 = por %p167, %p168
      %p171 = scmp.ne.s32.totalorder %s156, %s170
      %p172 = scmp.eq.s32.totalorder %s27, 0
      %p173 = por %p171, %p172
      %s174 = ssub.s32 %s28, %s47
      %s175 = ssub.s32 %s29, %s43
      %s176 = sor.u32 %s174, %s175
      %p177 = scmp.eq.s32.totalorder %s176, 0
      %s179 = sadd.s32 %s178, 1
      %s180 = scalar_select %p177, %s178, %s179
      %p183 = pneg %p177
      %p184 = scmp.eq.s32.totalorder %s21, 1
      %p185 = por %p183, %p184
      %p186 = scmp.ne.s32.totalorder %s178, %s181
      %p187 = scmp.eq.s32.totalorder %s21, 0
      %p188 = por %p186, %p187
      %p189 = scmp.ne.s32.totalorder %s178, %s181
      %p190 = scmp.eq.s32.totalorder %s26, 1
      %p191 = por %p189, %p190
      %p192 = scmp.ne.s32.totalorder %s181, %s182
      %p193 = scmp.eq.s32.totalorder %s26, 0
      %p194 = por %p192, %p193
      %p195 = scmp.ne.s32.totalorder %s181, %s182
      %p196 = scmp.eq.s32.totalorder %s27, 1
      %p197 = por %p195, %p196
      %p199 = scmp.ne.s32.totalorder %s182, %s198
      %p200 = scmp.eq.s32.totalorder %s27, 0
      %p201 = por %p199, %p200
      %p202 = scmp.le.s32.totalorder 1, %s21
      %p203 = scmp.lt.s32.totalorder %s21, 3
      %p204 = pnand %p202, %p203
      %p205 = pneg %p204
      // Predicated region
      $region9: #{tpu_custom_call.1} parent=5 // pred_check
        _
      $region10: #{tpu_custom_call.1} parent=5 // pred_check_branch
        %207 = sbr.rel (%p204) target = $region12
      $region11: #{tpu_custom_call.1} parent=5 // pred_region
        %s208 = ssub.s32 %s21, 1
        // Predicated region
        $region13: #{tpu_custom_call.1} parent=11 // pred_check
          %p209 = pneg %p145
        $region14: #{tpu_custom_call.1} parent=11 // pred_check_branch
          %211 = sbr.rel (%p209) target = $region16
        $region15: #{tpu_custom_call.1} parent=11 // pred_region
          %213 = vsyncadd [#allocation13], 0
          %s214 = sshll.u32 %s3, 4
          %s215 = int_to_ptr.hbm [resolvable:$true] %s214
          %s216 = sshll.u32 [#allocation12], 4
          %s217 = int_to_ptr.vmem [resolvable:$true] %s216
          %222 = dma.hbm_to_vmem [thread:$0]  %s215, 256, %s217, [#allocation13], 64, 64, 4
        $region16: #{tpu_custom_call.1} parent=11 // pred_fallthru
          _
        // Predicated region
        $region17: #{tpu_custom_call.1} parent=11 // pred_check
          %p223 = pneg %p166
        $region18: #{tpu_custom_call.1} parent=11 // pred_check_branch
          %225 = sbr.rel (%p223) target = $region20
        $region19: #{tpu_custom_call.1} parent=11 // pred_region
          _
        $region20: #{tpu_custom_call.1} parent=11 // pred_fallthru
          _
      $region12: #{tpu_custom_call.1} parent=5 // pred_fallthru
        _
      %p226 = scmp.lt.s32.totalorder %s21, 2
      // Predicated region
      $region21: #{tpu_custom_call.1} parent=5 // pred_check
        %p227 = pneg %p226
      $region22: #{tpu_custom_call.1} parent=5 // pred_check_branch
        %229 = sbr.rel (%p227) target = $region24
      $region23: #{tpu_custom_call.1} parent=5 // pred_region
        // Predicated region
        $region25: #{tpu_custom_call.1} parent=23 // pred_check
          %p230 = pneg %p62
        $region26: #{tpu_custom_call.1} parent=23 // pred_check_branch
          %232 = sbr.rel (%p230) target = $region28
        $region27: #{tpu_custom_call.1} parent=23 // pred_region
          %s233 = sand.u32 %s52, 1
          %s234 = scalar_lea.sflag [#allocation7], %s233
          %s235 = sand.u32 %s52, 1
          %s236 = smul.addr %s235, 8
          %s237 = scalar_lea.vmem [#allocation6], %s236
          %239 = vsyncadd %s234, 0
          %s240 = smul.addr %s28, 2
          %s241 = sadd.s32 %s29, %s240
          %s242 = smul.addr %s241, 4
          %s243 = scalar_lea.hbm %s0, %s242
          %s244 = sshll.u32 %s243, 4
          %s245 = int_to_ptr.hbm [resolvable:$true] %s244
          %s246 = sshll.u32 %s237, 4
          %s247 = int_to_ptr.vmem [resolvable:$true] %s246
          %252 = dma.hbm_to_vmem [thread:$0]  %s245, 128, %s247, %s234, 64, 64, 4
        $region28: #{tpu_custom_call.1} parent=23 // pred_fallthru
          _
        // Predicated region
        $region29: #{tpu_custom_call.1} parent=23 // pred_check
          %p253 = pneg %p90
        $region30: #{tpu_custom_call.1} parent=23 // pred_check_branch
          %255 = sbr.rel (%p253) target = $region32
        $region31: #{tpu_custom_call.1} parent=23 // pred_region
          %s256 = sand.u32 %s21, 1
          %s257 = scalar_lea.sflag [#allocation10], %s256
          %s258 = sand.u32 %s80, 1
          %s259 = smul.addr %s258, 8
          %s260 = scalar_lea.vmem [#allocation9], %s259
          %262 = vsyncadd %s257, 0
          %s263 = smul.addr %s28, 2
          %s264 = sadd.s32 %s30, %s263
          %s265 = smul.addr %s264, 4
          %s266 = scalar_lea.hbm %s1, %s265
          %s267 = sshll.u32 %s266, 4
          %s268 = int_to_ptr.hbm [resolvable:$true] %s267
          %s269 = sshll.u32 %s260, 4
          %s270 = int_to_ptr.vmem [resolvable:$true] %s269
          %275 = dma.hbm_to_vmem [thread:$0]  %s268, 128, %s270, %s257, 64, 64, 4
        $region32: #{tpu_custom_call.1} parent=23 // pred_fallthru
          _
        // Predicated region
        $region33: #{tpu_custom_call.1} parent=23 // pred_check
          %p276 = pneg %p118
        $region34: #{tpu_custom_call.1} parent=23 // pred_check_branch
          %278 = sbr.rel (%p276) target = $region36
        $region35: #{tpu_custom_call.1} parent=23 // pred_region
          %s279 = sand.u32 %s21, 1
          %s280 = scalar_lea.sflag [#allocation10], %s279
          %s281 = sand.u32 %s108, 1
          %s282 = smul.addr %s281, 8
          %s283 = scalar_lea.vmem [#allocation11], %s282
          %285 = vsyncadd %s280, 0
          %s286 = smul.addr %s28, 2
          %s287 = sadd.s32 %s30, %s286
          %s288 = smul.addr %s287, 4
          %s289 = scalar_lea.hbm %s2, %s288
          %s290 = sshll.u32 %s289, 4
          %s291 = int_to_ptr.hbm [resolvable:$true] %s290
          %s292 = sshll.u32 %s283, 4
          %s293 = int_to_ptr.vmem [resolvable:$true] %s292
          %298 = dma.hbm_to_vmem [thread:$0]  %s291, 128, %s293, %s280, 64, 64, 4
        $region36: #{tpu_custom_call.1} parent=23 // pred_fallthru
          _
      $region24: #{tpu_custom_call.1} parent=5 // pred_fallthru
        _
      %p299 = scmp.le.s32.totalorder 1, %s21
      %p300 = scmp.lt.s32.totalorder %s21, 3
      %p301 = pnand %p299, %p300
      %p302 = pneg %p301
      // Predicated region
      $region37: #{tpu_custom_call.1} parent=5 // pred_check
        _
      $region38: #{tpu_custom_call.1} parent=5 // pred_check_branch
        %304 = sbr.rel (%p301) target = $region40
      $region39: #{tpu_custom_call.1} parent=5 // pred_region
        %s305 = ssub.s32 %s21, 1
        %s306 = sand.u32 %s55, 1
        %s307 = scalar_lea.sflag [#allocation7], %s306
        %s308 = sand.u32 %s55, 1
        %s309 = smul.addr %s308, 8
        %s310 = scalar_lea.vmem [#allocation6], %s309
        // Predicated region
        $region41: #{tpu_custom_call.1} parent=39 // pred_check
          %p311 = pneg %p68
        $region42: #{tpu_custom_call.1} parent=39 // pred_check_branch
          %313 = sbr.rel (%p311) target = $region44
        $region43: #{tpu_custom_call.1} parent=39 // pred_region
          %315 = dma.done %s307, 128
        $region44: #{tpu_custom_call.1} parent=39 // pred_fallthru
          _
        %s316 = sand.u32 %s26, 1
        %s317 = scalar_lea.sflag [#allocation10], %s316
        %s318 = sand.u32 %s83, 1
        %s319 = smul.addr %s318, 8
        %s320 = scalar_lea.vmem [#allocation9], %s319
        // Predicated region
        $region45: #{tpu_custom_call.1} parent=39 // pred_check
          %p321 = pneg %p96
        $region46: #{tpu_custom_call.1} parent=39 // pred_check_branch
          %323 = sbr.rel (%p321) target = $region48
        $region47: #{tpu_custom_call.1} parent=39 // pred_region
          %325 = dma.done %s317, 128
        $region48: #{tpu_custom_call.1} parent=39 // pred_fallthru
          _
        %s326 = sand.u32 %s26, 1
        %s327 = scalar_lea.sflag [#allocation10], %s326
        %s328 = sand.u32 %s111, 1
        %s329 = smul.addr %s328, 8
        %s330 = scalar_lea.vmem [#allocation11], %s329
        // Predicated region
        $region49: #{tpu_custom_call.1} parent=39 // pred_check
          %p331 = pneg %p124
        $region50: #{tpu_custom_call.1} parent=39 // pred_check_branch
          %333 = sbr.rel (%p331) target = $region52
        $region51: #{tpu_custom_call.1} parent=39 // pred_region
          %335 = dma.done %s327, 128
        $region52: #{tpu_custom_call.1} parent=39 // pred_fallthru
          _
        // Predicated region
        $region53: #{tpu_custom_call.1} parent=39 // pred_check
          %p336 = pneg %p145
        $region54: #{tpu_custom_call.1} parent=39 // pred_check_branch
          %338 = sbr.rel (%p336) target = $region56
        $region55: #{tpu_custom_call.1} parent=39 // pred_region
          %340 = dma.done [#allocation13], 256
        $region56: #{tpu_custom_call.1} parent=39 // pred_fallthru
          _
        %s341 = sand.u32 %s55, 1
        %s342 = scalar_lea.sflag [#allocation7], %s341
        %s343 = sand.u32 %s55, 1
        %s344 = smul.addr %s343, 8
        %s345 = scalar_lea.vmem [#allocation6], %s344
        %p346 = pneg %p68
        %p347 = pneg %p65
        %s348 = sand.u32 %s26, 1
        %s349 = scalar_lea.sflag [#allocation10], %s348
        %s350 = sand.u32 %s83, 1
        %s351 = smul.addr %s350, 8
        %s352 = scalar_lea.vmem [#allocation9], %s351
        %p353 = pneg %p96
        %p354 = pneg %p93
        %s355 = sand.u32 %s26, 1
        %s356 = scalar_lea.sflag [#allocation10], %s355
        %s357 = sand.u32 %s111, 1
        %s358 = smul.addr %s357, 8
        %s359 = scalar_lea.vmem [#allocation11], %s358
        %p360 = pneg %p124
        %p361 = pneg %p121
        %p362 = pneg %p145
        %p363 = pneg %p142
        %p364 = pneg %p166
        %p365 = pneg %p163
        %p366 = pneg %p194
        %p367 = pneg %p191
        %s368 = sand.u32 %s181, 1
        %s369 = scalar_lea.sflag [#allocation8], %s368
        %s370 = sand.u32 %s181, 1
        %s371 = smul.addr %s370, 8
        %s372 = scalar_lea.vmem [#allocation14], %s371
        %p374 = scmp.eq.s32.totalorder %s33, 0
        // Predicated region
        $region57: #{tpu_custom_call.1} parent=39 // pred_check
          %p375 = pneg %p374
        $region58: #{tpu_custom_call.1} parent=39 // pred_check_branch
          %377 = sbr.rel (%p375) target = $region60
        $region59: #{tpu_custom_call.1} parent=39 // pred_region
          %vm378 = vcmask 7168
          %379 = vst.msk [vmem:[#allocation2] sm:$0xff] %vm378, -inf
          %380 = vst.msk [vmem:[#allocation2 + $0x8] sm:$0xff] %vm378, -inf
          %381 = vst.msk [vmem:[#allocation3] sm:$0xff] %vm378, 0.0
          %382 = vst.msk [vmem:[#allocation3 + $0x8] sm:$0xff] %vm378, 0.0
          %vm383 = vcmask 130048
          %384 = vst.msk [vmem:[#allocation4] sm:$0xff] %vm383, 0.0
          %385 = vst.msk [vmem:[#allocation4 + $0x8] sm:$0xff] %vm383, 0.0
        $region60: #{tpu_custom_call.1} parent=39 // pred_fallthru
          _
        %v386 = vld [vmem:[%s310] sm:$0xf]
        %v387 = vld [vmem:[%s310 + $0x4] sm:$0xf]
        %v388 = vld [vmem:[%s320] sm:$0xf]
        %v389 = vld [vmem:[%s320 + $0x4] sm:$0xf]
        %v390 = vld [vmem:[%s330] sm:$0xf]
        %v391 = vld [vmem:[%s330 + $0x4] sm:$0xf]
        %vm392 = vcmask 130048
        %v394 = vsel %vm392, %v386, 0
        %v397 = vsel %vm392, %v388, 0
        %399 = vmatpush.bf16.xpose.msra.mxu0 0
        %400 = vmatpush.bf16.xpose.msra.mxu0 0
        %401 = vmatpush.bf16.xpose.msra.mxu0 0
        %402 = vmatpush.bf16.xpose.msra.mxu0 0
        %403 = vmatpush.bf16.xpose.msra.mxu0 0
        %404 = vmatpush.bf16.xpose.msra.mxu0 0
        %405 = vmatpush.bf16.xpose.msra.mxu0 0
        %406 = vmatpush.bf16.xpose.msra.mxu0 %v397
        %407 = vmatmul.bf16.gmra.mxu0 %v394
        %v408 = vpop.f32.mrf.mxu0
        %v409 = vadd.f32 0.0, %v408
        %v410 = vpop.f32.mrf.mxu0
        %411 = vdwg.mxu0
        %v413 = vsel %vm392, %v387, 0
        %v416 = vsel %vm392, %v389, 0
        %418 = vmatpush.bf16.xpose.msra.mxu0 0
        %419 = vmatpush.bf16.xpose.msra.mxu0 0
        %420 = vmatpush.bf16.xpose.msra.mxu0 0
        %421 = vmatpush.bf16.xpose.msra.mxu0 0
        %422 = vmatpush.bf16.xpose.msra.mxu0 0
        %423 = vmatpush.bf16.xpose.msra.mxu0 0
        %424 = vmatpush.bf16.xpose.msra.mxu0 0
        %425 = vmatpush.bf16.xpose.msra.mxu0 %v416
        %426 = vmatmul.bf16.gmra.mxu0 %v413
        %v427 = vpop.f32.mrf.mxu0
        %v428 = vadd.f32 0.0, %v427
        %v429 = vpop.f32.mrf.mxu0
        %430 = vdwg.mxu0
        %v431 = vld [vmem:[#allocation2] sm:$0xff]
        %v432 = vld [vmem:[#allocation2 + $0x8] sm:$0xff]
        %vm433 = vcmask 64512
        %v434 = vsel %vm433, %v409, -inf
        %435 = vmax.xlane.f32.xlu0 %v434
        %v436 = vpop.xlane.xlu0 %435
        %v437 = vsel %vm433, %v428, -inf
        %438 = vmax.xlane.f32.xlu0 %v437
        %v439 = vpop.xlane.xlu0 %438
        %v440 = vmax.f32 %v431, %v436
        %v441 = vmax.f32 %v432, %v439
        %v442 = vsub.f32 %v431, %v440
        %v443 = vsub.f32 %v432, %v441
        %v444 = vmul.f32 %v442, 1.442695
        %v445 = vpow.pop %v444
        %v446 = vmul.f32 %v443, 1.442695
        %v447 = vpow.pop %v446
        %449 = vset.pattern.permute.xlu0 0
        %450 = vperm.xlu0 %449, %v440
        %v451 = vpop.permute.xlu0 %450
        %454 = vset.pattern.permute.xlu0 0
        %455 = vperm.xlu0 %454, %v441
        %v456 = vpop.permute.xlu0 %455
        %v458 = vsub.f32 %v409, %v451
        %v459 = vsub.f32 %v428, %v456
        %v460 = vmul.f32 %v458, 1.442695
        %v461 = vpow.pop %v460
        %v462 = vmul.f32 %v459, 1.442695
        %v463 = vpow.pop %v462
        %v464 = vld [vmem:[#allocation3] sm:$0xff]
        %v465 = vld [vmem:[#allocation3 + $0x8] sm:$0xff]
        %v466 = vmul.f32 %v445, %v464
        %v467 = vmul.f32 %v447, %v465
        %v468 = vsel %vm433, %v461, 0.0
        %469 = vadd.xlane.f32.xlu0 %v468
        %v470 = vpop.xlane.xlu0 %469
        %v471 = vsel %vm433, %v463, 0.0
        %472 = vadd.xlane.f32.xlu0 %v471
        %v473 = vpop.xlane.xlu0 %472
        %v474 = vadd.f32 %v466, %v470
        %v475 = vadd.f32 %v467, %v473
        %vm476 = vcmask 7168
        %477 = vst.msk [vmem:[#allocation3] sm:$0xff] %vm476, %v474
        %478 = vst.msk [vmem:[#allocation3 + $0x8] sm:$0xff] %vm476, %v475
        %v479 = vld [vmem:[#allocation4] sm:$0xff]
        %v480 = vld [vmem:[#allocation4 + $0x8] sm:$0xff]
        %482 = vset.pattern.permute.xlu0 0
        %483 = vperm.xlu0 %482, %v445
        %v484 = vpop.permute.xlu0 %483
        %487 = vset.pattern.permute.xlu0 0
        %488 = vperm.xlu0 %487, %v447
        %v489 = vpop.permute.xlu0 %488
        %v491 = vmul.f32 %v484, %v479
        %v492 = vmul.f32 %v489, %v480
        %v493 = vpack.c.bf16 %v461, %v461
        %v494 = vpack.c.bf16 %v463, %v463
        %v496 = vsel %vm433, %v493, 0
        %vm498 = vcmask 1043456
        %v500 = vsel %vm498, %v390, 0
        %502 = vmatpush.bf16.msra.mxu0 0
        %503 = vmatpush.bf16.msra.mxu0 0
        %504 = vmatpush.bf16.msra.mxu0 0
        %505 = vmatpush.bf16.msra.mxu0 0
        %506 = vmatpush.bf16.msra.mxu0 0
        %507 = vmatpush.bf16.msra.mxu0 0
        %508 = vmatpush.bf16.msra.mxu0 0
        %509 = vmatpush.bf16.msra.mxu0 %v500
        %510 = vmatmul.bf16.gmra.mxu0 %v496
        %v511 = vpop.f32.mrf.mxu0
        %v512 = vadd.f32 0.0, %v511
        %v513 = vpop.f32.mrf.mxu0
        %514 = vdwg.mxu0
        %v516 = vsel %vm433, %v494, 0
        %v519 = vsel %vm498, %v391, 0
        %521 = vmatpush.bf16.msra.mxu0 0
        %522 = vmatpush.bf16.msra.mxu0 0
        %523 = vmatpush.bf16.msra.mxu0 0
        %524 = vmatpush.bf16.msra.mxu0 0
        %525 = vmatpush.bf16.msra.mxu0 0
        %526 = vmatpush.bf16.msra.mxu0 0
        %527 = vmatpush.bf16.msra.mxu0 0
        %528 = vmatpush.bf16.msra.mxu0 %v519
        %529 = vmatmul.bf16.gmra.mxu0 %v516
        %v530 = vpop.f32.mrf.mxu0
        %v531 = vadd.f32 0.0, %v530
        %v532 = vpop.f32.mrf.mxu0
        %533 = vdwg.mxu0
        %v534 = vadd.f32 %v491, %v512
        %v535 = vadd.f32 %v492, %v531
        %536 = vst.msk [vmem:[#allocation4] sm:$0xff] %vm392, %v534
        %537 = vst.msk [vmem:[#allocation4 + $0x8] sm:$0xff] %vm392, %v535
        %538 = vst.msk [vmem:[#allocation2] sm:$0xff] %vm476, %v440
        %539 = vst.msk [vmem:[#allocation2 + $0x8] sm:$0xff] %vm476, %v441
        // Predicated region
        $region61: #{tpu_custom_call.1} parent=39 // pred_check
          %p540 = pneg %p374
        $region62: #{tpu_custom_call.1} parent=39 // pred_check_branch
          %542 = sbr.rel (%p540) target = $region64
        $region63: #{tpu_custom_call.1} parent=39 // pred_region
          %v543 = vld [vmem:[#allocation3] sm:$0xff]
          %v544 = vrcp.pop %v543
          %v545 = vld [vmem:[#allocation4] sm:$0xff]
          %547 = vset.pattern.permute.xlu0 0
          %548 = vperm.xlu0 %547, %v544
          %v549 = vpop.permute.xlu0 %548
          %v551 = vmul.f32 %v545, %v549
          %v552 = vpack.c.bf16 %v551, %v551
          %vm553 = vcmask 125952
          %554 = vst.msk [vmem:[#allocation5] sm:$0xf] %vm553, %v552
          %s555 = scalar_lea.vmem [#allocation3], 8
          %v556 = vld [vmem:[%s555] sm:$0xff]
          %v557 = vrcp.pop %v556
          %s558 = scalar_lea.vmem [#allocation4], 8
          %v559 = vld [vmem:[%s558] sm:$0xff]
          %561 = vset.pattern.permute.xlu0 0
          %562 = vperm.xlu0 %561, %v557
          %v563 = vpop.permute.xlu0 %562
          %v565 = vmul.f32 %v559, %v563
          %v566 = vpack.c.bf16 %v565, %v565
          %568 = vrot.lane.b32.xlu0 %v566, 16
          %v569 = vpop.permute.xlu0 %568
          %vm571 = vcmask 257152
          %572 = vst.msk [vmem:[#allocation5] sm:$0xf] %vm571, %v569
          %v573 = vld [vmem:[#allocation5] sm:$0xf]
          %v574 = vld [vmem:[#allocation12] sm:$0xf]
          %v575 = vld [vmem:[#allocation12 + $0x4] sm:$0xf]
          %v576 = vld [vmem:[#allocation12 + $0x8] sm:$0xf]
          %v577 = vld [vmem:[#allocation12 + $0xc] sm:$0xf]
          %v578 = vld [vmem:[%s4] sm:$0x1]
          %v580 = vperm.slane %v578, 0
          %v586 = vunpack.c.l.b16 %v574
          %v587 = vunpack.c.l.b16 %v575
          %v588 = vunpack.c.l.b16 %v576
          %v589 = vunpack.c.l.b16 %v577
          %v590 = vpack.c.b16 %v587, %v586
          %v591 = vpack.c.b16 %v589, %v588
          %vm594 = vcmask 261120
          %v596 = vsel %vm594, %v573, 0
          %598 = vmatpush.bf16.msra.mxu0 0
          %599 = vmatpush.bf16.msra.mxu0 0
          %600 = vmatpush.bf16.msra.mxu0 0
          %601 = vmatpush.bf16.msra.mxu0 0
          %602 = vmatpush.bf16.msra.mxu0 0
          %603 = vmatpush.bf16.msra.mxu0 0
          %604 = vmatpush.bf16.msra.mxu0 %v591
          %605 = vmatpush.bf16.msra.mxu0 %v590
          %606 = vmatmul.bf16.gmra.mxu0 %v596
          %v607 = vpop.f32.mrf.mxu0
          %v608 = vadd.f32 %v580, %v607
          %v609 = vpop.f32.mrf.mxu0
          %610 = vdwg.mxu0
          %611 = vst.msk [vmem:[%s372] sm:$0xff] %vm594, %v608
        $region64: #{tpu_custom_call.1} parent=39 // pred_fallthru
          _
        %s612 = sand.u32 %s181, 1
        %s613 = scalar_lea.sflag [#allocation8], %s612
        %s614 = sand.u32 %s181, 1
        %s615 = smul.addr %s614, 8
        %s616 = scalar_lea.vmem [#allocation14], %s615
        // Predicated region
        $region65: #{tpu_custom_call.1} parent=39 // pred_check
          %p617 = pneg %p191
        $region66: #{tpu_custom_call.1} parent=39 // pred_check_branch
          %619 = sbr.rel (%p617) target = $region68
        $region67: #{tpu_custom_call.1} parent=39 // pred_region
          %621 = vsyncadd %s613, 0
          %s622 = sadd.s32 %s32, %s31
          %s623 = smul.addr %s622, 8
          %s624 = scalar_lea.hbm %s5, %s623
          %s626 = sshll.u32 %s616, 4
          %s627 = int_to_ptr.vmem [resolvable:$true] %s626
          %s628 = sshll.u32 %s624, 4
          %s629 = int_to_ptr.hbm [resolvable:$true] %s628
          %631 = dma.vmem_to_hbm [thread:$0]  %s627, 128, %s629, %s613
        $region68: #{tpu_custom_call.1} parent=39 // pred_fallthru
          _
      $region40: #{tpu_custom_call.1} parent=5 // pred_fallthru
        _
      %p632 = scmp.le.s32.totalorder 2, %s21
      // Predicated region
      $region69: #{tpu_custom_call.1} parent=5 // pred_check
        %p633 = pneg %p632
      $region70: #{tpu_custom_call.1} parent=5 // pred_check_branch
        %635 = sbr.rel (%p633) target = $region72
      $region71: #{tpu_custom_call.1} parent=5 // pred_region
        %s636 = ssub.s32 %s21, 2
        // Predicated region
        $region73: #{tpu_custom_call.1} parent=71 // pred_check
          %p637 = pneg %p197
        $region74: #{tpu_custom_call.1} parent=71 // pred_check_branch
          %639 = sbr.rel (%p637) target = $region76
        $region75: #{tpu_custom_call.1} parent=71 // pred_region
          %s640 = sand.u32 %s182, 1
          %s641 = scalar_lea.sflag [#allocation8], %s640
          %s642 = sand.u32 %s182, 1
          %s643 = smul.addr %s642, 8
          %s644 = scalar_lea.vmem [#allocation14], %s643
          %646 = dma.done %s641, 128
        $region76: #{tpu_custom_call.1} parent=71 // pred_fallthru
          _
      $region72: #{tpu_custom_call.1} parent=5 // pred_fallthru
        _
    $region6: #{tpu_custom_call.1} parent=1 // loop_footer
      %s25 = sadd.s32 1, %s21
    $region7: #{tpu_custom_call.1} parent=1 // loop_footer_branch
      %20 = sbr.rel target = $region3
    $region8: #{tpu_custom_call.1} parent=1 // loop_exit
      _
    %647 = vsyncpa [#allocation7], 1
    %s648 = scalar_lea.sflag [#allocation7], 1
    %649 = vsyncpa %s648, 1
    %650 = vsyncpa [#allocation10], 1
    %s651 = scalar_lea.sflag [#allocation10], 1
    %652 = vsyncpa %s651, 1
    %653 = vsyncpa [#allocation13], 1
    %654 = vsyncpa [#allocation8], 1
    %s655 = scalar_lea.sflag [#allocation8], 1
    %656 = vsyncpa %s655, 1

</llo_original>
